<compile_context>
chip_gen: v5e
topology: v5e:2x2
jax: 0.10.0
libtpu: 0.0.40
codegen_flags: <defaults>
</compile_context>

<pallas_src>
import jax
import jax.numpy as jnp
from jax import lax
from jax.experimental import pallas as pl
from jax.experimental.pallas import tpu as pltpu


def _head_kernel(xT_ref, w3T_ref, w1T_ref, b1_ref, out_ref):
    # xT_ref : (Kpad, B*HW)  im2col patches, channel-major; row K is constant 1.0
    # w3T_ref: (Cmid, Kpad)  BN-folded 3x3 weight; column K carries the BN shift
    # w1T_ref: (n_cls, Cmid) 1x1 conv weight (transposed)
    # b1_ref : (n_cls, 1)    1x1 conv bias (f32)
    # out_ref: (B, n_cls, HW)
    B, _, HW = out_ref.shape

    # 3x3 conv + BatchNorm (folded) as ONE MXU matmul, then ReLU in f32 (VPU).
    y = jnp.maximum(
        jnp.dot(w3T_ref[...], xT_ref[...], preferred_element_type=jnp.float32),
        0.0)                                                     # (Cmid, B*HW) f32
    # TODO(synk): Dropout2d is identity in eval mode; training-mode channel
    # dropout (pltpu.prng_*) is not implemented here.

    # 1x1 conv == channel projection + bias (f32 accumulation, f32 epilogue).
    out = jnp.dot(w1T_ref[...], y.astype(w1T_ref.dtype),
                  preferred_element_type=jnp.float32) + b1_ref[...]   # (n_cls, B*HW)

    # Split the lane axis back into batch elements; HW is a multiple of 128 so
    # every slice / store stays lane-dense (no masked vst), no wrapper transpose.
    for b in range(B):                       # static Python loop, B is tiny
        out_ref[b] = out[:, b * HW:(b + 1) * HW].astype(out_ref.dtype)


def head_forward(x_nchw, w3, gamma, beta, run_mean, run_var, w1, b1,
                 eps=1e-5, use_bf16=True):
    """Runs the Head forward pass (eval mode).

    x_nchw: (B, Cin, H, W) float32   (PyTorch layout)
    w3    : (Cmid, Cin, 3, 3)        (PyTorch Conv2d weight layout)
    w1    : (classes, Cmid, 1, 1)
    Returns (B, classes, H, W) float32.

    use_bf16=True feeds bf16 operands to the MXU (native fast path on v6e/v7x,
    avoids multi-pass f32 emulation on v5e) with f32 accumulation; numerics
    deviate from PyTorch beyond weight rounding.  Pass use_bf16=False for a
    numerically faithful f32 path.
    """
    B, Cin, H, W = x_nchw.shape
    Cmid = w3.shape[0]
    n_cls = w1.shape[0]
    HW = H * W
    assert HW % 128 == 0, (
        "head_forward assumes H*W is a multiple of 128 (lane-dense output); "
        f"got H*W={HW}. Pad the spatial dims in the caller.")
    K = 9 * Cin

    cdt = jnp.bfloat16 if use_bf16 else jnp.float32    # MXU operand dtype
    align = 16 if use_bf16 else 8                      # sublane packing alignment
    Kpad = ((K + 1 + align - 1) // align) * align      # +1 row for the BN shift

    # ---- wrapper-side glue: channel-major im2col + parameter folding --------
    # Only the small padded input (B*Cin*(H+2)*(W+2) floats, ~10 KiB here) is
    # transposed; the 10x-expanded patch tensor is produced directly in its
    # final (Kpad, B*HW) layout.  Tap/feature ordering: (kh*3 + kw)*Cin + c.
    x_pad = jnp.pad(x_nchw, ((0, 0), (0, 0), (1, 1), (1, 1)))       # (B,Cin,H+2,W+2)
    x_padT = jnp.transpose(x_pad, (1, 0, 2, 3))                     # (Cin,B,H+2,W+2)
    taps = [x_padT[:, :, dh:dh + H, dw:dw + W].reshape(Cin, B * HW)
            for dh in range(3) for dw in range(3)]                  # 9 x (Cin, B*HW)
    ones_row = jnp.ones((1, B * HW), x_nchw.dtype)                  # BN-shift carrier
    zero_rows = jnp.zeros((Kpad - K - 1, B * HW), x_nchw.dtype)
    patches_T = jnp.concatenate(taps + [ones_row, zero_rows],
                                axis=0).astype(cdt)                 # (Kpad, B*HW)

    # 3x3 weight: (Cmid,Cin,3,3) -> (3,3,Cin,Cmid) -> (K,Cmid) -> (Cmid,K),
    # then fold BN: scale per output channel, shift into column K.
    w3_mat = jnp.transpose(w3, (2, 3, 1, 0)).reshape(K, Cmid).T     # (Cmid, K)
    bn_scale = (gamma / jnp.sqrt(run_var + eps)).astype(jnp.float32)  # (Cmid,)
    bn_shift = (beta - run_mean * bn_scale).astype(jnp.float32)       # (Cmid,)
    w3_full = jnp.concatenate(
        [w3_mat.astype(jnp.float32) * bn_scale[:, None],
         bn_shift[:, None],
         jnp.zeros((Cmid, Kpad - K - 1), jnp.float32)],
        axis=1).astype(cdt)                                          # (Cmid, Kpad)

    # 1x1 weight: (classes,Cmid,1,1) -> (classes,Cmid)
    w1_T = w1.reshape(n_cls, Cmid).astype(cdt)
    b1_col = b1.astype(jnp.float32).reshape(n_cls, 1)

    itemsize = jnp.dtype(cdt).itemsize
    cost = pl.CostEstimate(
        flops=2 * B * HW * (Kpad * Cmid + Cmid * n_cls),
        transcendentals=0,
        bytes_accessed=(Kpad * B * HW * itemsize        # patches
                        + Cmid * Kpad * itemsize        # folded 3x3 weight
                        + n_cls * Cmid * itemsize       # 1x1 weight
                        + n_cls * 4                     # bias
                        + B * n_cls * HW * 4))          # output

    out = pl.pallas_call(
        _head_kernel,
        out_shape=jax.ShapeDtypeStruct((B, n_cls, HW), jnp.float32),
        grid_spec=pltpu.PrefetchScalarGridSpec(
            num_scalar_prefetch=0,
            grid=(1,),                                   # single step: everything fits
            in_specs=[
                pl.BlockSpec((Kpad, B * HW), lambda i: (0, 0)),
                pl.BlockSpec((Cmid, Kpad), lambda i: (0, 0)),
                pl.BlockSpec((n_cls, Cmid), lambda i: (0, 0)),
                pl.BlockSpec((n_cls, 1), lambda i: (0, 0)),
            ],
            out_specs=pl.BlockSpec((B, n_cls, HW), lambda i: (0, 0, 0)),
        ),
        compiler_params=pltpu.CompilerParams(
            dimension_semantics=("arbitrary",),
            vmem_limit_bytes=32 * 1024 * 1024),
        cost_estimate=cost,
    )(patches_T, w3_full, w1_T, b1_col)

    # (B, n_cls, HW) is already NCHW-ordered -> free reshape, no transpose.
    return out.reshape(B, n_cls, H, W)


def _reference(x_nchw, w3, gamma, beta, run_mean, run_var, w1, b1, eps=1e-5):
    """Pure-JAX reference (NCHW convs) for correctness check."""
    y = lax.conv_general_dilated(
        x_nchw, w3, window_strides=(1, 1), padding=((1, 1), (1, 1)),
        dimension_numbers=("NCHW", "OIHW", "NCHW"))
    scale = gamma / jnp.sqrt(run_var + eps)
    shift = beta - run_mean * scale
    y = y * scale[None, :, None, None] + shift[None, :, None, None]
    y = jnp.maximum(y, 0.0)
    y = lax.conv_general_dilated(
        y, w1, window_strides=(1, 1), padding=((0, 0), (0, 0)),
        dimension_numbers=("NCHW", "OIHW", "NCHW"))
    return y + b1[None, :, None, None]


if __name__ == "__main__":
    B, Cin, H, W = 2, 4, 16, 16
    Cmid, n_cls = 32, 8

    key = jax.random.PRNGKey(0)
    ks = jax.random.split(key, 8)
    x = jax.random.normal(ks[0], (B, Cin, H, W), jnp.float32)

    # Deterministic synthetic parameters (shapes match nn.Module __init__).
    w3 = jax.random.normal(ks[1], (Cmid, Cin, 3, 3), jnp.float32) * 0.1
    gamma = jnp.abs(jax.random.normal(ks[2], (Cmid,), jnp.float32)) + 0.5
    beta = jax.random.normal(ks[3], (Cmid,), jnp.float32) * 0.1
    run_mean = jax.random.normal(ks[4], (Cmid,), jnp.float32) * 0.1
    run_var = jnp.abs(jax.random.normal(ks[5], (Cmid,), jnp.float32)) + 0.5
    w1 = jax.random.normal(ks[6], (n_cls, Cmid, 1, 1), jnp.float32) * 0.1
    b1 = jax.random.normal(ks[7], (n_cls,), jnp.float32) * 0.1

    ref = _reference(x, w3, gamma, beta, run_mean, run_var, w1, b1)

    # f32 MXU path: numerically faithful to the PyTorch module.
    out_f32 = head_forward(x, w3, gamma, beta, run_mean, run_var, w1, b1,
                           use_bf16=False)
    out_f32 = jax.block_until_ready(out_f32)
    assert out_f32.shape == (B, n_cls, H, W)
    assert jnp.allclose(out_f32, ref, atol=1e-4, rtol=1e-4), \
        float(jnp.max(jnp.abs(out_f32 - ref)))

    # bf16-operand MXU path (v6e/v7x native fast path), f32 acc + f32 epilogue.
    out_bf16 = head_forward(x, w3, gamma, beta, run_mean, run_var, w1, b1,
                            use_bf16=True)
    out_bf16 = jax.block_until_ready(out_bf16)
    assert out_bf16.shape == (B, n_cls, H, W)
    assert jnp.allclose(out_bf16, ref, atol=2e-1, rtol=2e-1), \
        float(jnp.max(jnp.abs(out_bf16 - ref)))

    print("KERNEL_OK")
</pallas_src>

<mosaic_0001>
module attributes {stable_mosaic.version = 11 : i64} {
  func.func @_head_kernel(%arg0: i32, %arg1: memref<40x512xf32, #tpu.memory_space<vmem>>, %arg2: memref<32x40xf32, #tpu.memory_space<vmem>>, %arg3: memref<8x32xf32, #tpu.memory_space<vmem>>, %arg4: memref<8x1xf32, #tpu.memory_space<vmem>>, %arg5: memref<2x8x256xf32, #tpu.memory_space<vmem>>) attributes {dimension_semantics = [#tpu.dimension_semantics<arbitrary>], iteration_bounds = array<i64: 1>, scalar_prefetch = 0 : i64, scratch_operands = 0 : i64, tpu.core_type = #tpu.core_type<tc>, window_params = [{pipeline_mode = #tpu.pipeline_mode<synchronous>, transform_indices = @transform_0, window_bounds = array<i64: 40, 512>}, {pipeline_mode = #tpu.pipeline_mode<synchronous>, transform_indices = @transform_1, window_bounds = array<i64: 32, 40>}, {pipeline_mode = #tpu.pipeline_mode<synchronous>, transform_indices = @transform_2, window_bounds = array<i64: 8, 32>}, {pipeline_mode = #tpu.pipeline_mode<synchronous>, transform_indices = @transform_3, window_bounds = array<i64: 8, 1>}, {pipeline_mode = #tpu.pipeline_mode<synchronous>, transform_indices = @transform_4, window_bounds = array<i64: 2, 8, 256>}]} {
    %c0 = arith.constant 0 : index
    %c0_0 = arith.constant 0 : index
    %0 = vector.load %arg2[%c0, %c0_0] : memref<32x40xf32, #tpu.memory_space<vmem>>, vector<32x40xf32>
    %c0_1 = arith.constant 0 : index
    %c0_2 = arith.constant 0 : index
    %1 = vector.load %arg1[%c0_1, %c0_2] : memref<40x512xf32, #tpu.memory_space<vmem>>, vector<40x512xf32>
    %cst = arith.constant dense<0.000000e+00> : vector<32x512xf32>
    %2 = tpu.matmul %0, %1, %cst {dimension_numbers = #tpu.dot_dimension_numbers<[1], [0], [0], [1], [0, 0, 1, 1], [], []>} : vector<32x40xf32>, vector<40x512xf32>, vector<32x512xf32> -> vector<32x512xf32>
    %cst_3 = arith.constant 0.000000e+00 : f32
    %3 = vector.broadcast %cst_3 : f32 to vector<32x512xf32>
    %4 = arith.maximumf %2, %3 : vector<32x512xf32>
    %c0_4 = arith.constant 0 : index
    %c0_5 = arith.constant 0 : index
    %5 = vector.load %arg3[%c0_4, %c0_5] : memref<8x32xf32, #tpu.memory_space<vmem>>, vector<8x32xf32>
    %cst_6 = arith.constant dense<0.000000e+00> : vector<8x512xf32>
    %6 = tpu.matmul %5, %4, %cst_6 {dimension_numbers = #tpu.dot_dimension_numbers<[1], [0], [0], [1], [0, 0, 1, 1], [], []>} : vector<8x32xf32>, vector<32x512xf32>, vector<8x512xf32> -> vector<8x512xf32>
    %c0_7 = arith.constant 0 : index
    %c0_8 = arith.constant 0 : index
    %7 = vector.load %arg4[%c0_7, %c0_8] : memref<8x1xf32, #tpu.memory_space<vmem>>, vector<8x1xf32>
    %8 = vector.broadcast %7 : vector<8x1xf32> to vector<8x512xf32>
    %9 = arith.addf %6, %8 : vector<8x512xf32>
    %10 = vector.extract_strided_slice %9 {offsets = [0, 0], sizes = [8, 256], strides = [1, 1]} : vector<8x512xf32> to vector<8x256xf32>
    %c0_9 = arith.constant 0 : index
    %c0_10 = arith.constant 0 : index
    %c0_11 = arith.constant 0 : index
    %11 = vector.load %arg5[%c0_9, %c0_10, %c0_11] : memref<2x8x256xf32, #tpu.memory_space<vmem>>, vector<1x8x256xf32>
    %12 = vector.shape_cast %11 : vector<1x8x256xf32> to vector<8x256xf32>
    %13 = vector.shape_cast %10 : vector<8x256xf32> to vector<1x8x256xf32>
    tpu.vector_store %arg5[%c0_9, %c0_10, %c0_11], %13 {strides = array<i32>} : memref<2x8x256xf32, #tpu.memory_space<vmem>>, vector<1x8x256xf32>,
    %14 = vector.extract_strided_slice %9 {offsets = [0, 256], sizes = [8, 256], strides = [1, 1]} : vector<8x512xf32> to vector<8x256xf32>
    %c1 = arith.constant 1 : index
    %c0_12 = arith.constant 0 : index
    %c0_13 = arith.constant 0 : index
    %15 = vector.load %arg5[%c1, %c0_12, %c0_13] : memref<2x8x256xf32, #tpu.memory_space<vmem>>, vector<1x8x256xf32>
    %16 = vector.shape_cast %15 : vector<1x8x256xf32> to vector<8x256xf32>
    %17 = vector.shape_cast %14 : vector<8x256xf32> to vector<1x8x256xf32>
    tpu.vector_store %arg5[%c1, %c0_12, %c0_13], %17 {strides = array<i32>} : memref<2x8x256xf32, #tpu.memory_space<vmem>>, vector<1x8x256xf32>,
    return
  }
  func.func @transform_0(%arg0: i32) -> (i32, i32) {
    %c0_i32 = arith.constant 0 : i32
    %c0_i32_0 = arith.constant 0 : i32
    %c0_i32_1 = arith.constant 0 : i32
    return %c0_i32, %c0_i32_0 : i32, i32
  }
  func.func @transform_1(%arg0: i32) -> (i32, i32) {
    %c0_i32 = arith.constant 0 : i32
    %c0_i32_0 = arith.constant 0 : i32
    %c0_i32_1 = arith.constant 0 : i32
    return %c0_i32, %c0_i32_0 : i32, i32
  }
  func.func @transform_2(%arg0: i32) -> (i32, i32) {
    %c0_i32 = arith.constant 0 : i32
    %c0_i32_0 = arith.constant 0 : i32
    %c0_i32_1 = arith.constant 0 : i32
    return %c0_i32, %c0_i32_0 : i32, i32
  }
  func.func @transform_3(%arg0: i32) -> (i32, i32) {
    %c0_i32 = arith.constant 0 : i32
    %c0_i32_0 = arith.constant 0 : i32
    %c0_i32_1 = arith.constant 0 : i32
    return %c0_i32, %c0_i32_0 : i32, i32
  }
  func.func @transform_4(%arg0: i32) -> (i32, i32, i32) {
    %c0_i32 = arith.constant 0 : i32
    %c0_i32_0 = arith.constant 0 : i32
    %c0_i32_1 = arith.constant 0 : i32
    %c0_i32_2 = arith.constant 0 : i32
    return %c0_i32, %c0_i32_0, %c0_i32_1 : i32, i32, i32
  }
}

</mosaic_0001>

<llo_original>
// kernel: tpu_custom_call.1
$region0: #{tpu_custom_call.1}
  #allocation0 [shape = 'u32[]', space=smem, size = 0x4, offset = 0x4, fixed_abs, tag = 'smem constant byte address 0x4 - core index']
  #allocation1 [shape = 'u32[72,128]{1,0:T(1,128)}', space=vmem, size = 0x9000, scoped, tag = 'internal scratch']
  %s0 = inlined_call_operand.hbm [shape: f32[40,512], index: 0, kind: input, shape index: {}]
  %s1 = inlined_call_operand.hbm [shape: f32[32,40], index: 1, kind: input, shape index: {}]
  %s2 = inlined_call_operand.vmem [shape: f32[8,32], index: 2, kind: input, shape index: {}]
  %s3 = inlined_call_operand.vmem [shape: f32[8,1], index: 3, kind: input, shape index: {}]
  %s4 = inlined_call_operand.hbm [shape: f32[2,8,256], index: 4, kind: output, shape index: {}]
  %s5 = sld [smem:[#allocation0]]
  $region34: #{tpu_custom_call.1} parent=0
    _
  %s7 = ssub.s32 1, %s5
  %s8 = scalar_select 0, %s7, %s5
  $region1: #{tpu_custom_call.1} parent=0
    #allocation2 [shape = 'u8[81920]{0}', space=vmem, size = 0x14000, scoped, tag = 'input window, operand 0, single buffered']
    #allocation3 [shape = 's32[1]{0}', space=sflag, size = 0x4, scoped, tag = 'scoped memory for tpu_custom_call.1']
    #allocation4 [shape = 's32[1]{0}', space=sflag, size = 0x4, scoped, tag = 'scoped memory for tpu_custom_call.1']
    #allocation5 [shape = 'u8[16384]{0}', space=vmem, size = 0x4000, scoped, tag = 'input window, operand 1, single buffered']
    #allocation6 [shape = 's32[1]{0}', space=sflag, size = 0x4, scoped, tag = 'scoped memory for tpu_custom_call.1']
    #allocation7 [shape = 'u8[16384]{0}', space=vmem, size = 0x4000, scoped, tag = 'output window, operand 0, single buffered']
    %9 = vsyncpa [#allocation3], 0
    %10 = vsyncpa [#allocation6], 0
    %11 = vsyncpa [#allocation4], 0
    // Predicated region
    $region2: #{tpu_custom_call.1} parent=1 // pred_check
      _
    $region3: #{tpu_custom_call.1} parent=1 // pred_check_branch
      %13 = sbr.rel (0) target = $region5
    $region4: #{tpu_custom_call.1} parent=1 // pred_region
      %15 = vsyncadd [#allocation3], 0
      %s16 = sshll.u32 %s0, 4
      %s17 = int_to_ptr.hbm [resolvable:$true] %s16
      %s18 = sshll.u32 [#allocation2], 4
      %s19 = int_to_ptr.vmem [resolvable:$true] %s18
      %24 = dma.hbm_to_vmem [thread:$0]  %s17, 2560, %s19, [#allocation3], 512, 512, 32
    $region5: #{tpu_custom_call.1} parent=1 // pred_fallthru
      _
    // Predicated region
    $region6: #{tpu_custom_call.1} parent=1 // pred_check
      _
    $region7: #{tpu_custom_call.1} parent=1 // pred_check_branch
      %26 = sbr.rel (0) target = $region9
    $region8: #{tpu_custom_call.1} parent=1 // pred_region
      %28 = vsyncadd [#allocation6], 0
      %s29 = sshll.u32 %s1, 4
      %s30 = int_to_ptr.hbm [resolvable:$true] %s29
      %s31 = sshll.u32 [#allocation5], 4
      %s32 = int_to_ptr.vmem [resolvable:$true] %s31
      %37 = dma.hbm_to_vmem [thread:$0]  %s30, 512, %s32, [#allocation6], 128, 128, 8
    $region9: #{tpu_custom_call.1} parent=1 // pred_fallthru
      _
    // Predicated region
    $region10: #{tpu_custom_call.1} parent=1 // pred_check
      _
    $region11: #{tpu_custom_call.1} parent=1 // pred_check_branch
      %39 = sbr.rel (0) target = $region13
    $region12: #{tpu_custom_call.1} parent=1 // pred_region
      _
    $region13: #{tpu_custom_call.1} parent=1 // pred_fallthru
      _
    // Predicated region
    $region14: #{tpu_custom_call.1} parent=1 // pred_check
      _
    $region15: #{tpu_custom_call.1} parent=1 // pred_check_branch
      %41 = sbr.rel (0) target = $region17
    $region16: #{tpu_custom_call.1} parent=1 // pred_region
      _
    $region17: #{tpu_custom_call.1} parent=1 // pred_fallthru
      _
    // Predicated region
    $region18: #{tpu_custom_call.1} parent=1 // pred_check
      _
    $region19: #{tpu_custom_call.1} parent=1 // pred_check_branch
      %43 = sbr.rel (0) target = $region21
    $region20: #{tpu_custom_call.1} parent=1 // pred_region
      %45 = dma.done [#allocation3], 2560
    $region21: #{tpu_custom_call.1} parent=1 // pred_fallthru
      _
    // Predicated region
    $region22: #{tpu_custom_call.1} parent=1 // pred_check
      _
    $region23: #{tpu_custom_call.1} parent=1 // pred_check_branch
      %47 = sbr.rel (0) target = $region25
    $region24: #{tpu_custom_call.1} parent=1 // pred_region
      %49 = dma.done [#allocation6], 512
    $region25: #{tpu_custom_call.1} parent=1 // pred_fallthru
      _
    %v50 = vld [vmem:[#allocation5] sm:$0xff]
    %v51 = vld [vmem:[#allocation5 + $0x8] sm:$0xff]
    %v52 = vld [vmem:[#allocation5 + $0x10] sm:$0xff]
    %v53 = vld [vmem:[#allocation5 + $0x18] sm:$0xff]
    %v54 = vld [vmem:[#allocation2] sm:$0xff]
    %v55 = vld [vmem:[#allocation2 + $0x8] sm:$0xff]
    %v56 = vld [vmem:[#allocation2 + $0x10] sm:$0xff]
    %v57 = vld [vmem:[#allocation2 + $0x18] sm:$0xff]
    %v58 = vld [vmem:[#allocation2 + $0x20] sm:$0xff]
    %v59 = vld [vmem:[#allocation2 + $0x28] sm:$0xff]
    %v60 = vld [vmem:[#allocation2 + $0x30] sm:$0xff]
    %v61 = vld [vmem:[#allocation2 + $0x38] sm:$0xff]
    %v62 = vld [vmem:[#allocation2 + $0x40] sm:$0xff]
    %v63 = vld [vmem:[#allocation2 + $0x48] sm:$0xff]
    %v64 = vld [vmem:[#allocation2 + $0x50] sm:$0xff]
    %v65 = vld [vmem:[#allocation2 + $0x58] sm:$0xff]
    %v66 = vld [vmem:[#allocation2 + $0x60] sm:$0xff]
    %v67 = vld [vmem:[#allocation2 + $0x68] sm:$0xff]
    %v68 = vld [vmem:[#allocation2 + $0x70] sm:$0xff]
    %v69 = vld [vmem:[#allocation2 + $0x78] sm:$0xff]
    %v70 = vld [vmem:[#allocation2 + $0x80] sm:$0xff]
    %v71 = vld [vmem:[#allocation2 + $0x88] sm:$0xff]
    %v72 = vld [vmem:[#allocation2 + $0x90] sm:$0xff]
    %v73 = vld [vmem:[#allocation2 + $0x98] sm:$0xff]
    %vm74 = vcmask 326656
    %v76 = vsel %vm74, %v50, 0
    %v79 = vsel %vm74, %v51, 0
    %v82 = vsel %vm74, %v52, 0
    %v85 = vsel %vm74, %v53, 0
    %87 = vmatpush.msra.mxu0 0.0
    %88 = vmatpush.msra.mxu0 0.0
    %89 = vmatpush.msra.mxu0 0.0
    %90 = vmatpush.msra.mxu0 0.0
    %91 = vmatpush.msra.mxu0 0.0
    %92 = vmatpush.msra.mxu0 0.0
    %93 = vmatpush.msra.mxu0 0.0
    %94 = vmatpush.msra.mxu0 0.0
    %95 = vmatpush.msra.mxu0 0.0
    %96 = vmatpush.msra.mxu0 0.0
    %97 = vmatpush.msra.mxu0 0.0
    %98 = vmatpush.msra.mxu0 %v70
    %99 = vmatpush.msra.mxu0 %v66
    %100 = vmatpush.msra.mxu0 %v62
    %101 = vmatpush.msra.mxu0 %v58
    %102 = vmatpush.msra.mxu0 %v54
    %103 = vmatmul.f32.gmra.mxu0 %v76
    %v104 = vpop.f32.mrf.mxu0
    %v105 = vadd.f32 0.0, %v104
    %106 = vmatmul.f32.gmra.mxu0 %v79
    %v107 = vpop.f32.mrf.mxu0
    %v108 = vadd.f32 0.0, %v107
    %109 = vmatmul.f32.gmra.mxu0 %v82
    %v110 = vpop.f32.mrf.mxu0
    %v111 = vadd.f32 0.0, %v110
    %112 = vmatmul.f32.gmra.mxu0 %v85
    %v113 = vpop.f32.mrf.mxu0
    %v114 = vadd.f32 0.0, %v113
    %115 = vdwg.mxu0
    %116 = vmatpush.msra.mxu0 0.0
    %117 = vmatpush.msra.mxu0 0.0
    %118 = vmatpush.msra.mxu0 0.0
    %119 = vmatpush.msra.mxu0 0.0
    %120 = vmatpush.msra.mxu0 0.0
    %121 = vmatpush.msra.mxu0 0.0
    %122 = vmatpush.msra.mxu0 0.0
    %123 = vmatpush.msra.mxu0 0.0
    %124 = vmatpush.msra.mxu0 0.0
    %125 = vmatpush.msra.mxu0 0.0
    %126 = vmatpush.msra.mxu0 0.0
    %127 = vmatpush.msra.mxu0 %v71
    %128 = vmatpush.msra.mxu0 %v67
    %129 = vmatpush.msra.mxu0 %v63
    %130 = vmatpush.msra.mxu0 %v59
    %131 = vmatpush.msra.mxu0 %v55
    %132 = vmatmul.f32.gmra.mxu0 %v76
    %v133 = vpop.f32.mrf.mxu0
    %v134 = vadd.f32 0.0, %v133
    %135 = vmatmul.f32.gmra.mxu0 %v79
    %v136 = vpop.f32.mrf.mxu0
    %v137 = vadd.f32 0.0, %v136
    %138 = vmatmul.f32.gmra.mxu0 %v82
    %v139 = vpop.f32.mrf.mxu0
    %v140 = vadd.f32 0.0, %v139
    %141 = vmatmul.f32.gmra.mxu0 %v85
    %v142 = vpop.f32.mrf.mxu0
    %v143 = vadd.f32 0.0, %v142
    %144 = vdwg.mxu0
    %145 = vmatpush.msra.mxu0 0.0
    %146 = vmatpush.msra.mxu0 0.0
    %147 = vmatpush.msra.mxu0 0.0
    %148 = vmatpush.msra.mxu0 0.0
    %149 = vmatpush.msra.mxu0 0.0
    %150 = vmatpush.msra.mxu0 0.0
    %151 = vmatpush.msra.mxu0 0.0
    %152 = vmatpush.msra.mxu0 0.0
    %153 = vmatpush.msra.mxu0 0.0
    %154 = vmatpush.msra.mxu0 0.0
    %155 = vmatpush.msra.mxu0 0.0
    %156 = vmatpush.msra.mxu0 %v72
    %157 = vmatpush.msra.mxu0 %v68
    %158 = vmatpush.msra.mxu0 %v64
    %159 = vmatpush.msra.mxu0 %v60
    %160 = vmatpush.msra.mxu0 %v56
    %161 = vmatmul.f32.gmra.mxu0 %v76
    %v162 = vpop.f32.mrf.mxu0
    %v163 = vadd.f32 0.0, %v162
    %164 = vmatmul.f32.gmra.mxu0 %v79
    %v165 = vpop.f32.mrf.mxu0
    %v166 = vadd.f32 0.0, %v165
    %167 = vmatmul.f32.gmra.mxu0 %v82
    %v168 = vpop.f32.mrf.mxu0
    %v169 = vadd.f32 0.0, %v168
    %170 = vmatmul.f32.gmra.mxu0 %v85
    %v171 = vpop.f32.mrf.mxu0
    %v172 = vadd.f32 0.0, %v171
    %173 = vdwg.mxu0
    %174 = vmatpush.msra.mxu0 0.0
    %175 = vmatpush.msra.mxu0 0.0
    %176 = vmatpush.msra.mxu0 0.0
    %177 = vmatpush.msra.mxu0 0.0
    %178 = vmatpush.msra.mxu0 0.0
    %179 = vmatpush.msra.mxu0 0.0
    %180 = vmatpush.msra.mxu0 0.0
    %181 = vmatpush.msra.mxu0 0.0
    %182 = vmatpush.msra.mxu0 0.0
    %183 = vmatpush.msra.mxu0 0.0
    %184 = vmatpush.msra.mxu0 0.0
    %185 = vmatpush.msra.mxu0 %v73
    %186 = vmatpush.msra.mxu0 %v69
    %187 = vmatpush.msra.mxu0 %v65
    %188 = vmatpush.msra.mxu0 %v61
    %189 = vmatpush.msra.mxu0 %v57
    %190 = vmatmul.f32.gmra.mxu0 %v76
    %v191 = vpop.f32.mrf.mxu0
    %v192 = vadd.f32 0.0, %v191
    %193 = vmatmul.f32.gmra.mxu0 %v79
    %v194 = vpop.f32.mrf.mxu0
    %v195 = vadd.f32 0.0, %v194
    %196 = vmatmul.f32.gmra.mxu0 %v82
    %v197 = vpop.f32.mrf.mxu0
    %v198 = vadd.f32 0.0, %v197
    %199 = vmatmul.f32.gmra.mxu0 %v85
    %v200 = vpop.f32.mrf.mxu0
    %v201 = vadd.f32 0.0, %v200
    %202 = vdwg.mxu0
    %v203 = vmax.f32 %v105, 0.0
    %v204 = vmax.f32 %v134, 0.0
    %v205 = vmax.f32 %v163, 0.0
    %v206 = vmax.f32 %v192, 0.0
    %v207 = vmax.f32 %v108, 0.0
    %v208 = vmax.f32 %v137, 0.0
    %v209 = vmax.f32 %v166, 0.0
    %v210 = vmax.f32 %v195, 0.0
    %v211 = vmax.f32 %v111, 0.0
    %v212 = vmax.f32 %v140, 0.0
    %v213 = vmax.f32 %v169, 0.0
    %v214 = vmax.f32 %v198, 0.0
    %v215 = vmax.f32 %v114, 0.0
    %v216 = vmax.f32 %v143, 0.0
    %v217 = vmax.f32 %v172, 0.0
    %v218 = vmax.f32 %v201, 0.0
    %v219 = vld [vmem:[%s2] sm:$0xff]
    %v220 = vld [vmem:[%s3] sm:$0xff]
    %222 = vset.pattern.permute.xlu0 0
    %223 = vperm.xlu0 %222, %v220
    %v224 = vpop.permute.xlu0 %223
    %vm226 = vcmask 261120
    %v228 = vsel %vm226, %v219, 0
    %230 = vmatpush.msra.mxu0 0.0
    %231 = vmatpush.msra.mxu0 0.0
    %232 = vmatpush.msra.mxu0 0.0
    %233 = vmatpush.msra.mxu0 0.0
    %234 = vmatpush.msra.mxu0 0.0
    %235 = vmatpush.msra.mxu0 0.0
    %236 = vmatpush.msra.mxu0 0.0
    %237 = vmatpush.msra.mxu0 0.0
    %238 = vmatpush.msra.mxu0 0.0
    %239 = vmatpush.msra.mxu0 0.0
    %240 = vmatpush.msra.mxu0 0.0
    %241 = vmatpush.msra.mxu0 0.0
    %242 = vmatpush.msra.mxu0 %v215
    %243 = vmatpush.msra.mxu0 %v211
    %244 = vmatpush.msra.mxu0 %v207
    %245 = vmatpush.msra.mxu0 %v203
    %246 = vmatmul.f32.gmra.mxu0 %v228
    %v247 = vpop.f32.mrf.mxu0
    %v248 = vadd.f32 %v224, %v247
    %249 = vdwg.mxu0
    %250 = vmatpush.msra.mxu0 0.0
    %251 = vmatpush.msra.mxu0 0.0
    %252 = vmatpush.msra.mxu0 0.0
    %253 = vmatpush.msra.mxu0 0.0
    %254 = vmatpush.msra.mxu0 0.0
    %255 = vmatpush.msra.mxu0 0.0
    %256 = vmatpush.msra.mxu0 0.0
    %257 = vmatpush.msra.mxu0 0.0
    %258 = vmatpush.msra.mxu0 0.0
    %259 = vmatpush.msra.mxu0 0.0
    %260 = vmatpush.msra.mxu0 0.0
    %261 = vmatpush.msra.mxu0 0.0
    %262 = vmatpush.msra.mxu0 %v216
    %263 = vmatpush.msra.mxu0 %v212
    %264 = vmatpush.msra.mxu0 %v208
    %265 = vmatpush.msra.mxu0 %v204
    %266 = vmatmul.f32.gmra.mxu0 %v228
    %v267 = vpop.f32.mrf.mxu0
    %v268 = vadd.f32 %v224, %v267
    %269 = vdwg.mxu0
    %270 = vmatpush.msra.mxu0 0.0
    %271 = vmatpush.msra.mxu0 0.0
    %272 = vmatpush.msra.mxu0 0.0
    %273 = vmatpush.msra.mxu0 0.0
    %274 = vmatpush.msra.mxu0 0.0
    %275 = vmatpush.msra.mxu0 0.0
    %276 = vmatpush.msra.mxu0 0.0
    %277 = vmatpush.msra.mxu0 0.0
    %278 = vmatpush.msra.mxu0 0.0
    %279 = vmatpush.msra.mxu0 0.0
    %280 = vmatpush.msra.mxu0 0.0
    %281 = vmatpush.msra.mxu0 0.0
    %282 = vmatpush.msra.mxu0 %v217
    %283 = vmatpush.msra.mxu0 %v213
    %284 = vmatpush.msra.mxu0 %v209
    %285 = vmatpush.msra.mxu0 %v205
    %286 = vmatmul.f32.gmra.mxu0 %v228
    %v287 = vpop.f32.mrf.mxu0
    %v288 = vadd.f32 %v224, %v287
    %289 = vdwg.mxu0
    %290 = vmatpush.msra.mxu0 0.0
    %291 = vmatpush.msra.mxu0 0.0
    %292 = vmatpush.msra.mxu0 0.0
    %293 = vmatpush.msra.mxu0 0.0
    %294 = vmatpush.msra.mxu0 0.0
    %295 = vmatpush.msra.mxu0 0.0
    %296 = vmatpush.msra.mxu0 0.0
    %297 = vmatpush.msra.mxu0 0.0
    %298 = vmatpush.msra.mxu0 0.0
    %299 = vmatpush.msra.mxu0 0.0
    %300 = vmatpush.msra.mxu0 0.0
    %301 = vmatpush.msra.mxu0 0.0
    %302 = vmatpush.msra.mxu0 %v218
    %303 = vmatpush.msra.mxu0 %v214
    %304 = vmatpush.msra.mxu0 %v210
    %305 = vmatpush.msra.mxu0 %v206
    %306 = vmatmul.f32.gmra.mxu0 %v228
    %v307 = vpop.f32.mrf.mxu0
    %v308 = vadd.f32 %v224, %v307
    %309 = vdwg.mxu0
    %310 = vst [vmem:[#allocation7] sm:$0xff] %v248
    %311 = vst [vmem:[#allocation7 + $0x8] sm:$0xff] %v268
    %s312 = scalar_lea.vmem [#allocation7], 16
    %313 = vst [vmem:[%s312] sm:$0xff] %v288
    %314 = vst [vmem:[%s312 + $0x8] sm:$0xff] %v308
    // Predicated region
    $region26: #{tpu_custom_call.1} parent=1 // pred_check
      _
    $region27: #{tpu_custom_call.1} parent=1 // pred_check_branch
      %316 = sbr.rel (0) target = $region29
    $region28: #{tpu_custom_call.1} parent=1 // pred_region
      %318 = vsyncadd [#allocation4], 0
      %s319 = sshll.u32 [#allocation7], 4
      %s320 = int_to_ptr.vmem [resolvable:$true] %s319
      %s321 = sshll.u32 %s4, 4
      %s322 = int_to_ptr.hbm [resolvable:$true] %s321
      %327 = dma.vmem_to_hbm [thread:$0]  %s320, 512, %s322, [#allocation4], 256, 256, 16
    $region29: #{tpu_custom_call.1} parent=1 // pred_fallthru
      _
    // Predicated region
    $region30: #{tpu_custom_call.1} parent=1 // pred_check
      _
    $region31: #{tpu_custom_call.1} parent=1 // pred_check_branch
      %329 = sbr.rel (0) target = $region33
    $region32: #{tpu_custom_call.1} parent=1 // pred_region
      %331 = dma.done [#allocation4], 512
    $region33: #{tpu_custom_call.1} parent=1 // pred_fallthru
      _
    %332 = vsyncpa [#allocation3], 1
    %333 = vsyncpa [#allocation6], 1
    %334 = vsyncpa [#allocation4], 1

</llo_original>
